<compile_context>
chip_gen: v5e
topology: v5e:2x2
jax: 0.10.0
libtpu: 0.0.40
codegen_flags: <defaults>
</compile_context>

<pallas_src>
import functools

import jax
import jax.numpy as jnp
from jax import lax
from jax.experimental import pallas as pl
from jax.experimental.pallas import tpu as pltpu


def _round_up(x, m):
    return (x + m - 1) // m * m


def _classifier_kernel(emb_ref, labels_ref, wenc_ref, wct_ref,
                       logits_ref, loss_ref, *, num_labels, batch_size):
    """One TB-row batch tile per grid step.

    emb_ref    : VMEM [TB, Hp]     bf16  (wrapper-gathered EOS embedding rows)
    labels_ref : VMEM [TB, C]      int32
    wenc_ref   : VMEM [Hp, Hp]     bf16  (resident, single-buffered)
    wct_ref    : VMEM [Hp, C*Lp]   bf16  (resident, pre-transposed + padded)
    logits_ref : VMEM [TB, C*Lp]   f32   (lane-dense output)
    loss_ref   : VMEM [1, 1]       f32   (per-tile CE partial sum)
    """
    TB = emb_ref.shape[0]
    num_categories = labels_ref.shape[1]
    lane_pad = logits_ref.shape[1] // num_categories      # Lp, multiple of 128

    # ---- synthetic encoder on the batch tile: tanh((TB,Hp) @ (Hp,Hp)) ----
    hidden = jnp.tanh(jnp.dot(emb_ref[...], wenc_ref[...],
                              preferred_element_type=jnp.float32))    # (TB,Hp) f32

    # ---- per-category heads: (TB,Hp) @ (Hp, C*Lp), no in-kernel transpose ----
    logits = jnp.dot(hidden.astype(jnp.bfloat16), wct_ref[...],
                     preferred_element_type=jnp.float32)              # (TB,C*Lp) f32
    logits_ref[...] = logits                                          # lane-dense store

    # ---- cross-entropy over each 128-lane-aligned category segment ----
    lane = lax.broadcasted_iota(jnp.int32, (TB, lane_pad), 1)         # (TB, Lp)
    pad_mask = lane < num_labels                                      # hoisted
    neg_big = jnp.float32(-1e30)

    # Mask rows that were added by batch padding in the wrapper.
    row = (pl.program_id(0) * TB
           + lax.broadcasted_iota(jnp.int32, (TB, 1), 0))             # (TB, 1)
    row_valid = (row < batch_size).astype(jnp.float32)

    labels = labels_ref[...]                                          # (TB, C) i32
    nll = jnp.zeros((TB, 1), jnp.float32)
    for c in range(num_categories):                                   # small, unrolled
        z = jnp.where(pad_mask,
                      logits[:, c * lane_pad:(c + 1) * lane_pad],
                      neg_big)                                        # (TB, Lp)
        m = jnp.max(z, axis=-1, keepdims=True)                        # (TB, 1)
        lse = m + jnp.log(jnp.sum(jnp.exp(z - m), axis=-1, keepdims=True))
        # Select the label's logit via wide VPU compare/select (no scalar loads).
        # Selecting from the masked `z` ensures out-of-range labels can never
        # pick a padded-lane logit.
        picked = jnp.sum(jnp.where(lane == labels[:, c:c + 1], z, 0.0),
                         axis=-1, keepdims=True)                      # (TB, 1)
        nll = nll + (lse - picked)

    # One scalar partial sum per grid step (mean finished in the wrapper).
    loss_ref[...] = jnp.sum(nll * row_valid, keepdims=True)           # (1, 1)


def pack_classifier_weights(wenc, wc_flat, num_categories, num_labels):
    """Init-time weight packing (hoisted out of the per-call forward path)."""
    H = wenc.shape[0]
    C, L = num_categories, num_labels
    Hp = _round_up(H, 128)
    Lp = _round_up(L, 128)
    wenc_p = jnp.pad(wenc, ((0, Hp - H), (0, Hp - H))).astype(jnp.bfloat16)
    wc3 = jnp.pad(wc_flat.reshape(C, L, H),
                  ((0, 0), (0, Lp - L), (0, Hp - H)))                  # [C, Lp, Hp]
    wct = jnp.transpose(wc3, (2, 0, 1)).reshape(Hp, C * Lp).astype(jnp.bfloat16)
    return wenc_p, wct, Hp, Lp


def classifier_forward(emb, attention_mask, labels, packed_weights,
                       num_categories, num_labels, tb_target=256):
    """packed_weights = pack_classifier_weights(...) output (done once at init)."""
    wenc_p, wct, Hp, Lp = packed_weights
    B, S, H = emb.shape
    C, L = num_categories, num_labels

    # ---- wrapper-side EOS gather (no full [B,S,H] slab pad) ----
    seq_len = attention_mask.astype(jnp.int32).sum(axis=1)
    eos_pos = (seq_len - 1) % S          # matches torch's -1 wrap for empty masks
    eos_emb = emb[jnp.arange(B), eos_pos]                              # [B, H] f32

    # Batch tile: 128 (v5e) / 256 (v6e, v7x per-core); clamp for tiny batches.
    TB = min(tb_target, _round_up(B, 8))
    Bp = _round_up(B, TB)
    num_blocks = Bp // TB

    eos_emb = jnp.pad(eos_emb, ((0, Bp - B), (0, Hp - H))).astype(jnp.bfloat16)
    labels_i = jnp.pad(labels.astype(jnp.int32), ((0, Bp - B), (0, 0)))

    in_specs = [
        pl.BlockSpec((TB, Hp), lambda b: (b, 0)),                      # EOS rows
        pl.BlockSpec((TB, C), lambda b: (b, 0)),                       # labels
        # Weights are grid-invariant: constant index_map + single-buffered.
        pl.BlockSpec((Hp, Hp), lambda b: (0, 0), pipeline_mode=pl.Buffered(1)),
        pl.BlockSpec((Hp, C * Lp), lambda b: (0, 0), pipeline_mode=pl.Buffered(1)),
    ]
    out_specs = (
        pl.BlockSpec((TB, C * Lp), lambda b: (b, 0)),                  # lane-dense logits
        pl.BlockSpec((1, 1), lambda b: (b, 0)),                        # per-tile loss partial
    )

    flops = 2 * Bp * (Hp * Hp + Hp * C * Lp)
    bytes_accessed = (Bp * Hp * 2                      # gathered bf16 EOS rows
                      + (Hp * Hp + Hp * C * Lp) * 2    # bf16 weights (resident)
                      + Bp * C * 4                     # labels
                      + Bp * C * Lp * 4 + num_blocks * 4)  # outputs

    # VMEM budget from the actual buffers (weights single-buffered, streams 2x).
    vmem_needed = (Hp * Hp * 2 + Hp * C * Lp * 2
                   + 2 * TB * Hp * 2
                   + 2 * TB * 128 * 4                  # labels block, lane-padded
                   + 2 * TB * C * Lp * 4
                   + 2 * 8 * 128 * 4)
    vmem_limit = int(min(max(2 * vmem_needed, 16 * 1024 * 1024),
                         100 * 1024 * 1024))

    logits_pad, loss_part = pl.pallas_call(
        functools.partial(_classifier_kernel, num_labels=L, batch_size=B),
        grid=(num_blocks,),
        in_specs=in_specs,
        out_specs=out_specs,
        out_shape=(
            jax.ShapeDtypeStruct((Bp, C * Lp), jnp.float32),
            jax.ShapeDtypeStruct((num_blocks, 1), jnp.float32),
        ),
        compiler_params=pltpu.CompilerParams(
            dimension_semantics=("parallel",),
            vmem_limit_bytes=vmem_limit),
        cost_estimate=pl.CostEstimate(
            flops=flops,
            transcendentals=Bp * (Hp + C * Lp),
            bytes_accessed=bytes_accessed),
    )(eos_emb, labels_i, wenc_p, wct)

    logits = logits_pad[:B].reshape(B, C, Lp)[:, :, :L]
    loss = jnp.sum(loss_part) / (B * C)                # mean over B*C rows
    return loss, logits


def _reference(emb, wenc, attention_mask, wc_flat, labels, C, L):
    """Plain-JAX reference (same bf16-operand / f32-accumulate matmuls)."""
    B, S, H = emb.shape
    seq_len = attention_mask.astype(jnp.int32).sum(axis=1)
    eos_pos = (seq_len - 1) % S
    eos_emb = emb[jnp.arange(B), eos_pos]                                # [B, H]
    hidden = jnp.tanh(jnp.dot(eos_emb.astype(jnp.bfloat16),
                              wenc.astype(jnp.bfloat16),
                              preferred_element_type=jnp.float32))       # [B, H]
    logits = jnp.dot(hidden.astype(jnp.bfloat16),
                     wc_flat.astype(jnp.bfloat16).T,
                     preferred_element_type=jnp.float32).reshape(B, C, L)
    flat_logits = logits.reshape(B * C, L)
    flat_labels = labels.reshape(B * C)
    logp = jax.nn.log_softmax(flat_logits, axis=-1)
    loss = -jnp.mean(logp[jnp.arange(B * C), flat_labels])
    return loss, logits


if __name__ == "__main__":
    B, S, H = 2, 8, 32          # batch, sequence, hidden_size
    V = 50                      # vocab size (synthetic embedding table)
    C, L = 3, 5                 # num_categories, num_labels

    key = jax.random.PRNGKey(0)
    k_emb, k_enc, k_cls, k_ids, k_lbl = jax.random.split(key, 5)

    # Deterministic synthetic parameters.
    emb_table = jax.random.normal(k_emb, (V, H), dtype=jnp.float32) * 0.1
    wenc = jax.random.normal(k_enc, (H, H), dtype=jnp.float32) * 0.1
    # torch.nn.Linear(H, L, bias=False) weight is [L, H]; C heads stacked -> [C*L, H]
    wc_flat = jax.random.normal(k_cls, (C * L, H), dtype=jnp.float32) * 0.1

    # Inputs.
    input_ids = jax.random.randint(k_ids, (B, S), 0, V, dtype=jnp.int32)
    lengths = jnp.array([5, 8], dtype=jnp.int32)      # per-example valid lengths
    attention_mask = (jnp.arange(S)[None, :] < lengths[:, None]).astype(jnp.int32)
    labels = jax.random.randint(k_lbl, (B, C), 0, L, dtype=jnp.int32)

    # Embedding lookup is parameter glue (kept in plain JAX).
    emb = emb_table[input_ids]                         # [B, S, H] float32

    # Weight packing happens once, outside the per-call forward path.
    packed = pack_classifier_weights(wenc, wc_flat, C, L)

    loss, logits = classifier_forward(emb, attention_mask, labels, packed, C, L)
    jax.block_until_ready((loss, logits))

    ref_loss, ref_logits = _reference(emb, wenc, attention_mask, wc_flat,
                                      labels, C, L)
    assert jnp.allclose(logits, ref_logits, atol=2e-4, rtol=2e-4), "logits mismatch"
    assert jnp.allclose(loss, ref_loss, atol=2e-4, rtol=2e-4), "loss mismatch"

    print("KERNEL_OK")
</pallas_src>

<mosaic_0001>
module attributes {stable_mosaic.version = 11 : i64} {
  func.func @_classifier_kernel(%arg0: i32, %arg1: memref<8x128xbf16, #tpu.memory_space<vmem>>, %arg2: memref<8x3xi32, #tpu.memory_space<vmem>>, %arg3: memref<128x128xbf16, #tpu.memory_space<vmem>>, %arg4: memref<128x384xbf16, #tpu.memory_space<vmem>>, %arg5: memref<8x384xf32, #tpu.memory_space<vmem>>, %arg6: memref<1x1xf32, #tpu.memory_space<vmem>>) attributes {dimension_semantics = [#tpu.dimension_semantics<parallel>], iteration_bounds = array<i64: 1>, scalar_prefetch = 0 : i64, scratch_operands = 0 : i64, tpu.core_type = #tpu.core_type<tc>, window_params = [{transform_indices = @transform_0, window_bounds = array<i64: 8, 128>}, {transform_indices = @transform_1, window_bounds = array<i64: 8, 3>}, {pipeline_mode = #tpu.pipeline_mode<synchronous>, transform_indices = @transform_2, window_bounds = array<i64: 128, 128>}, {pipeline_mode = #tpu.pipeline_mode<synchronous>, transform_indices = @transform_3, window_bounds = array<i64: 128, 384>}, {transform_indices = @transform_4, window_bounds = array<i64: 8, 384>}, {transform_indices = @transform_5, window_bounds = array<i64: 1, 1>}]} {
    %c0 = arith.constant 0 : index
    %c0_0 = arith.constant 0 : index
    %0 = vector.load %arg1[%c0, %c0_0] : memref<8x128xbf16, #tpu.memory_space<vmem>>, vector<8x128xbf16>
    %c0_1 = arith.constant 0 : index
    %c0_2 = arith.constant 0 : index
    %1 = vector.load %arg3[%c0_1, %c0_2] : memref<128x128xbf16, #tpu.memory_space<vmem>>, vector<128x128xbf16>
    %cst = arith.constant dense<0.000000e+00> : vector<8x128xf32>
    %2 = tpu.matmul %0, %1, %cst {dimension_numbers = #tpu.dot_dimension_numbers<[1], [0], [0], [1], [0, 0, 1, 1], [], []>} : vector<8x128xbf16>, vector<128x128xbf16>, vector<8x128xf32> -> vector<8x128xf32>
    %3 = math.tanh %2 : vector<8x128xf32>
    %4 = arith.truncf %3 : vector<8x128xf32> to vector<8x128xbf16>
    %c0_3 = arith.constant 0 : index
    %c0_4 = arith.constant 0 : index
    %5 = vector.load %arg4[%c0_3, %c0_4] : memref<128x384xbf16, #tpu.memory_space<vmem>>, vector<128x384xbf16>
    %cst_5 = arith.constant dense<0.000000e+00> : vector<8x384xf32>
    %6 = tpu.matmul %4, %5, %cst_5 {dimension_numbers = #tpu.dot_dimension_numbers<[1], [0], [0], [1], [0, 0, 1, 1], [], []>} : vector<8x128xbf16>, vector<128x384xbf16>, vector<8x384xf32> -> vector<8x384xf32>
    %c0_6 = arith.constant 0 : index
    %c0_7 = arith.constant 0 : index
    %7 = vector.load %arg5[%c0_6, %c0_7] : memref<8x384xf32, #tpu.memory_space<vmem>>, vector<8x384xf32>
    tpu.vector_store %arg5[%c0_6, %c0_7], %6 {strides = array<i32>} : memref<8x384xf32, #tpu.memory_space<vmem>>, vector<8x384xf32>,
    %8 = tpu.iota {dimensions = array<i32: 1>} : vector<8x128xi32>
    %c5_i32 = arith.constant 5 : i32
    %9 = vector.broadcast %c5_i32 : i32 to vector<8x128xi32>
    %10 = arith.cmpi slt, %8, %9 : vector<8x128xi32>
    %c8_i32 = arith.constant 8 : i32
    %11 = arith.muli %arg0, %c8_i32 : i32
    %12 = tpu.iota {dimensions = array<i32: 0>} : vector<8x1xi32>
    %13 = vector.broadcast %11 : i32 to vector<8x1xi32>
    %14 = arith.addi %13, %12 : vector<8x1xi32>
    %c2_i32 = arith.constant 2 : i32
    %15 = vector.broadcast %c2_i32 : i32 to vector<8x1xi32>
    %16 = arith.cmpi slt, %14, %15 : vector<8x1xi32>
    %17 = arith.extui %16 : vector<8x1xi1> to vector<8x1xi32>
    %18 = arith.sitofp %17 : vector<8x1xi32> to vector<8x1xf32>
    %c0_8 = arith.constant 0 : index
    %c0_9 = arith.constant 0 : index
    %19 = vector.load %arg2[%c0_8, %c0_9] : memref<8x3xi32, #tpu.memory_space<vmem>>, vector<8x3xi32>
    %cst_10 = arith.constant 0.000000e+00 : f32
    %20 = vector.broadcast %cst_10 : f32 to vector<8x1xf32>
    %21 = vector.extract_strided_slice %6 {offsets = [0, 0], sizes = [8, 128], strides = [1, 1]} : vector<8x384xf32> to vector<8x128xf32>
    %cst_11 = arith.constant -1.000000e+30 : f32
    %22 = vector.broadcast %cst_11 : f32 to vector<8x128xf32>
    %23 = arith.select %10, %21, %22 : vector<8x128xi1>, vector<8x128xf32>
    %cst_12 = arith.constant dense<0xFF800000> : vector<8xf32>
    %24 = vector.multi_reduction <maximumf>, %23, %cst_12 [1] : vector<8x128xf32> to vector<8xf32>
    %25 = vector.shape_cast %24 : vector<8xf32> to vector<8x1xf32>
    %26 = vector.broadcast %25 : vector<8x1xf32> to vector<8x128xf32>
    %27 = arith.subf %23, %26 : vector<8x128xf32>
    %28 = math.exp %27 : vector<8x128xf32>
    %cst_13 = arith.constant dense<0.000000e+00> : vector<8xf32>
    %29 = vector.multi_reduction <add>, %28, %cst_13 [1] : vector<8x128xf32> to vector<8xf32>
    %30 = vector.shape_cast %29 : vector<8xf32> to vector<8x1xf32>
    %31 = math.log %30 : vector<8x1xf32>
    %32 = arith.addf %25, %31 : vector<8x1xf32>
    %33 = vector.extract_strided_slice %19 {offsets = [0, 0], sizes = [8, 1], strides = [1, 1]} : vector<8x3xi32> to vector<8x1xi32>
    %34 = vector.broadcast %33 : vector<8x1xi32> to vector<8x128xi32>
    %35 = arith.cmpi eq, %8, %34 : vector<8x128xi32>
    %cst_14 = arith.constant 0.000000e+00 : f32
    %36 = vector.broadcast %cst_14 : f32 to vector<8x128xf32>
    %37 = arith.select %35, %23, %36 : vector<8x128xi1>, vector<8x128xf32>
    %cst_15 = arith.constant dense<0.000000e+00> : vector<8xf32>
    %38 = vector.multi_reduction <add>, %37, %cst_15 [1] : vector<8x128xf32> to vector<8xf32>
    %39 = vector.shape_cast %38 : vector<8xf32> to vector<8x1xf32>
    %40 = arith.subf %32, %39 : vector<8x1xf32>
    %41 = arith.addf %20, %40 : vector<8x1xf32>
    %42 = vector.extract_strided_slice %6 {offsets = [0, 128], sizes = [8, 128], strides = [1, 1]} : vector<8x384xf32> to vector<8x128xf32>
    %cst_16 = arith.constant -1.000000e+30 : f32
    %43 = vector.broadcast %cst_16 : f32 to vector<8x128xf32>
    %44 = arith.select %10, %42, %43 : vector<8x128xi1>, vector<8x128xf32>
    %cst_17 = arith.constant dense<0xFF800000> : vector<8xf32>
    %45 = vector.multi_reduction <maximumf>, %44, %cst_17 [1] : vector<8x128xf32> to vector<8xf32>
    %46 = vector.shape_cast %45 : vector<8xf32> to vector<8x1xf32>
    %47 = vector.broadcast %46 : vector<8x1xf32> to vector<8x128xf32>
    %48 = arith.subf %44, %47 : vector<8x128xf32>
    %49 = math.exp %48 : vector<8x128xf32>
    %cst_18 = arith.constant dense<0.000000e+00> : vector<8xf32>
    %50 = vector.multi_reduction <add>, %49, %cst_18 [1] : vector<8x128xf32> to vector<8xf32>
    %51 = vector.shape_cast %50 : vector<8xf32> to vector<8x1xf32>
    %52 = math.log %51 : vector<8x1xf32>
    %53 = arith.addf %46, %52 : vector<8x1xf32>
    %54 = vector.extract_strided_slice %19 {offsets = [0, 1], sizes = [8, 1], strides = [1, 1]} : vector<8x3xi32> to vector<8x1xi32>
    %55 = vector.broadcast %54 : vector<8x1xi32> to vector<8x128xi32>
    %56 = arith.cmpi eq, %8, %55 : vector<8x128xi32>
    %cst_19 = arith.constant 0.000000e+00 : f32
    %57 = vector.broadcast %cst_19 : f32 to vector<8x128xf32>
    %58 = arith.select %56, %44, %57 : vector<8x128xi1>, vector<8x128xf32>
    %cst_20 = arith.constant dense<0.000000e+00> : vector<8xf32>
    %59 = vector.multi_reduction <add>, %58, %cst_20 [1] : vector<8x128xf32> to vector<8xf32>
    %60 = vector.shape_cast %59 : vector<8xf32> to vector<8x1xf32>
    %61 = arith.subf %53, %60 : vector<8x1xf32>
    %62 = arith.addf %41, %61 : vector<8x1xf32>
    %63 = vector.extract_strided_slice %6 {offsets = [0, 256], sizes = [8, 128], strides = [1, 1]} : vector<8x384xf32> to vector<8x128xf32>
    %cst_21 = arith.constant -1.000000e+30 : f32
    %64 = vector.broadcast %cst_21 : f32 to vector<8x128xf32>
    %65 = arith.select %10, %63, %64 : vector<8x128xi1>, vector<8x128xf32>
    %cst_22 = arith.constant dense<0xFF800000> : vector<8xf32>
    %66 = vector.multi_reduction <maximumf>, %65, %cst_22 [1] : vector<8x128xf32> to vector<8xf32>
    %67 = vector.shape_cast %66 : vector<8xf32> to vector<8x1xf32>
    %68 = vector.broadcast %67 : vector<8x1xf32> to vector<8x128xf32>
    %69 = arith.subf %65, %68 : vector<8x128xf32>
    %70 = math.exp %69 : vector<8x128xf32>
    %cst_23 = arith.constant dense<0.000000e+00> : vector<8xf32>
    %71 = vector.multi_reduction <add>, %70, %cst_23 [1] : vector<8x128xf32> to vector<8xf32>
    %72 = vector.shape_cast %71 : vector<8xf32> to vector<8x1xf32>
    %73 = math.log %72 : vector<8x1xf32>
    %74 = arith.addf %67, %73 : vector<8x1xf32>
    %75 = vector.extract_strided_slice %19 {offsets = [0, 2], sizes = [8, 1], strides = [1, 1]} : vector<8x3xi32> to vector<8x1xi32>
    %76 = vector.broadcast %75 : vector<8x1xi32> to vector<8x128xi32>
    %77 = arith.cmpi eq, %8, %76 : vector<8x128xi32>
    %cst_24 = arith.constant 0.000000e+00 : f32
    %78 = vector.broadcast %cst_24 : f32 to vector<8x128xf32>
    %79 = arith.select %77, %65, %78 : vector<8x128xi1>, vector<8x128xf32>
    %cst_25 = arith.constant dense<0.000000e+00> : vector<8xf32>
    %80 = vector.multi_reduction <add>, %79, %cst_25 [1] : vector<8x128xf32> to vector<8xf32>
    %81 = vector.shape_cast %80 : vector<8xf32> to vector<8x1xf32>
    %82 = arith.subf %74, %81 : vector<8x1xf32>
    %83 = arith.addf %62, %82 : vector<8x1xf32>
    %84 = arith.mulf %83, %18 : vector<8x1xf32>
    %85 = vector.shape_cast %84 : vector<8x1xf32> to vector<1x8x1xf32>
    %cst_26 = arith.constant dense<0.000000e+00> : vector<1xf32>
    %86 = vector.multi_reduction <add>, %85, %cst_26 [1, 2] : vector<1x8x1xf32> to vector<1xf32>
    %87 = vector.shape_cast %86 : vector<1xf32> to vector<1x1x1xf32>
    %88 = vector.extract %87[0, 0, 0] : f32 from vector<1x1x1xf32>
    %89 = vector.broadcast %88 : f32 to vector<1x1xf32>
    %c0_27 = arith.constant 0 : index
    %c0_28 = arith.constant 0 : index
    %90 = vector.load %arg6[%c0_27, %c0_28] : memref<1x1xf32, #tpu.memory_space<vmem>>, vector<1x1xf32>
    tpu.vector_store %arg6[%c0_27, %c0_28], %89 {strides = array<i32>} : memref<1x1xf32, #tpu.memory_space<vmem>>, vector<1x1xf32>,
    return
  }
  func.func @transform_0(%arg0: i32) -> (i32, i32) {
    %c0_i32 = arith.constant 0 : i32
    %c0_i32_0 = arith.constant 0 : i32
    return %arg0, %c0_i32 : i32, i32
  }
  func.func @transform_1(%arg0: i32) -> (i32, i32) {
    %c0_i32 = arith.constant 0 : i32
    %c0_i32_0 = arith.constant 0 : i32
    return %arg0, %c0_i32 : i32, i32
  }
  func.func @transform_2(%arg0: i32) -> (i32, i32) {
    %c0_i32 = arith.constant 0 : i32
    %c0_i32_0 = arith.constant 0 : i32
    %c0_i32_1 = arith.constant 0 : i32
    return %c0_i32, %c0_i32_0 : i32, i32
  }
  func.func @transform_3(%arg0: i32) -> (i32, i32) {
    %c0_i32 = arith.constant 0 : i32
    %c0_i32_0 = arith.constant 0 : i32
    %c0_i32_1 = arith.constant 0 : i32
    return %c0_i32, %c0_i32_0 : i32, i32
  }
  func.func @transform_4(%arg0: i32) -> (i32, i32) {
    %c0_i32 = arith.constant 0 : i32
    %c0_i32_0 = arith.constant 0 : i32
    return %arg0, %c0_i32 : i32, i32
  }
  func.func @transform_5(%arg0: i32) -> (i32, i32) {
    %c0_i32 = arith.constant 0 : i32
    %c0_i32_0 = arith.constant 0 : i32
    return %arg0, %c0_i32 : i32, i32
  }
}

</mosaic_0001>

<llo_original>
// kernel: tpu_custom_call.1
$region0: #{tpu_custom_call.1}
  #allocation0 [shape = 'u32[]', space=smem, size = 0x4, offset = 0x4, fixed_abs, tag = 'smem constant byte address 0x4 - core index']
  #allocation1 [shape = 'u32[72,128]{1,0:T(1,128)}', space=vmem, size = 0x9000, scoped, tag = 'internal scratch']
  %s0 = inlined_call_operand.vmem [shape: bf16[8,128], index: 0, kind: input, shape index: {}]
  %s1 = inlined_call_operand.vmem [shape: s32[8,3], index: 1, kind: input, shape index: {}]
  %s2 = inlined_call_operand.hbm [shape: bf16[128,128], index: 2, kind: input, shape index: {}]
  %s3 = inlined_call_operand.hbm [shape: bf16[128,384], index: 3, kind: input, shape index: {}]
  %s4 = inlined_call_operand.hbm [shape: f32[8,384], index: 4, kind: output, shape index: {0}]
  %s5 = inlined_call_operand.hbm [shape: f32[1,1], index: 5, kind: output, shape index: {1}]
  %6 = xla_tuple %s4, %s5
  %s7 = sld [smem:[#allocation0]]
  $region42: #{tpu_custom_call.1} parent=0
    _
  %s9 = ssub.s32 1, %s7
  %s10 = scalar_select 0, %s9, %s7
  $region1: #{tpu_custom_call.1} parent=0
    #allocation2 [shape = 'u8[32768]{0}', space=vmem, size = 0x8000, scoped, tag = 'input window, operand 2, single buffered']
    #allocation3 [shape = 's32[1]{0}', space=sflag, size = 0x4, scoped, tag = 'scoped memory for tpu_custom_call.1']
    #allocation4 [shape = 's32[1]{0}', space=sflag, size = 0x4, scoped, tag = 'scoped memory for tpu_custom_call.1']
    #allocation5 [shape = 'u8[98304]{0}', space=vmem, size = 0x18000, scoped, tag = 'input window, operand 3, single buffered']
    #allocation6 [shape = 's32[1]{0}', space=sflag, size = 0x4, scoped, tag = 'scoped memory for tpu_custom_call.1']
    #allocation7 [shape = 'u8[12288]{0}', space=vmem, size = 0x3000, scoped, tag = 'output window, operand 0, single buffered']
    #allocation8 [shape = 'u8[512]{0}', space=vmem, size = 0x400, scoped, tag = 'output window, operand 1, single buffered']
    #allocation9 [shape = 's32[1]{0}', space=sflag, size = 0x4, scoped, tag = 'scoped memory for tpu_custom_call.1']
    %11 = vsyncpa [#allocation3], 0
    %12 = vsyncpa [#allocation6], 0
    %13 = vsyncpa [#allocation4], 0
    %14 = vsyncpa [#allocation9], 0
    // Predicated region
    $region2: #{tpu_custom_call.1} parent=1 // pred_check
      _
    $region3: #{tpu_custom_call.1} parent=1 // pred_check_branch
      %16 = sbr.rel (0) target = $region5
    $region4: #{tpu_custom_call.1} parent=1 // pred_region
      _
    $region5: #{tpu_custom_call.1} parent=1 // pred_fallthru
      _
    // Predicated region
    $region6: #{tpu_custom_call.1} parent=1 // pred_check
      _
    $region7: #{tpu_custom_call.1} parent=1 // pred_check_branch
      %18 = sbr.rel (0) target = $region9
    $region8: #{tpu_custom_call.1} parent=1 // pred_region
      _
    $region9: #{tpu_custom_call.1} parent=1 // pred_fallthru
      _
    // Predicated region
    $region10: #{tpu_custom_call.1} parent=1 // pred_check
      _
    $region11: #{tpu_custom_call.1} parent=1 // pred_check_branch
      %20 = sbr.rel (0) target = $region13
    $region12: #{tpu_custom_call.1} parent=1 // pred_region
      %22 = vsyncadd [#allocation3], 0
      %s23 = sshll.u32 %s2, 4
      %s24 = int_to_ptr.hbm [resolvable:$true] %s23
      %s25 = sshll.u32 [#allocation2], 4
      %s26 = int_to_ptr.vmem [resolvable:$true] %s25
      %31 = dma.hbm_to_vmem [thread:$0]  %s24, 1024, %s26, [#allocation3], 64, 64, 4
    $region13: #{tpu_custom_call.1} parent=1 // pred_fallthru
      _
    // Predicated region
    $region14: #{tpu_custom_call.1} parent=1 // pred_check
      _
    $region15: #{tpu_custom_call.1} parent=1 // pred_check_branch
      %33 = sbr.rel (0) target = $region17
    $region16: #{tpu_custom_call.1} parent=1 // pred_region
      %35 = vsyncadd [#allocation6], 0
      %s36 = sshll.u32 %s3, 4
      %s37 = int_to_ptr.hbm [resolvable:$true] %s36
      %s38 = sshll.u32 [#allocation5], 4
      %s39 = int_to_ptr.vmem [resolvable:$true] %s38
      %44 = dma.hbm_to_vmem [thread:$0]  %s37, 3072, %s39, [#allocation6], 192, 192, 12
    $region17: #{tpu_custom_call.1} parent=1 // pred_fallthru
      _
    // Predicated region
    $region18: #{tpu_custom_call.1} parent=1 // pred_check
      _
    $region19: #{tpu_custom_call.1} parent=1 // pred_check_branch
      %46 = sbr.rel (0) target = $region21
    $region20: #{tpu_custom_call.1} parent=1 // pred_region
      %48 = dma.done [#allocation3], 1024
    $region21: #{tpu_custom_call.1} parent=1 // pred_fallthru
      _
    // Predicated region
    $region22: #{tpu_custom_call.1} parent=1 // pred_check
      _
    $region23: #{tpu_custom_call.1} parent=1 // pred_check_branch
      %50 = sbr.rel (0) target = $region25
    $region24: #{tpu_custom_call.1} parent=1 // pred_region
      %52 = dma.done [#allocation6], 3072
    $region25: #{tpu_custom_call.1} parent=1 // pred_fallthru
      _
    %v53 = vld [vmem:[%s0] sm:$0xf]
    %v54 = vld [vmem:[#allocation2] sm:$0xf]
    %v55 = vld [vmem:[#allocation2 + $0x4] sm:$0xf]
    %v56 = vld [vmem:[#allocation2 + $0x8] sm:$0xf]
    %v57 = vld [vmem:[#allocation2 + $0xc] sm:$0xf]
    %v58 = vld [vmem:[#allocation2 + $0x10] sm:$0xf]
    %v59 = vld [vmem:[#allocation2 + $0x14] sm:$0xf]
    %v60 = vld [vmem:[#allocation2 + $0x18] sm:$0xf]
    %v61 = vld [vmem:[#allocation2 + $0x1c] sm:$0xf]
    %v62 = vld [vmem:[#allocation2 + $0x20] sm:$0xf]
    %v63 = vld [vmem:[#allocation2 + $0x24] sm:$0xf]
    %v64 = vld [vmem:[#allocation2 + $0x28] sm:$0xf]
    %v65 = vld [vmem:[#allocation2 + $0x2c] sm:$0xf]
    %v66 = vld [vmem:[#allocation2 + $0x30] sm:$0xf]
    %v67 = vld [vmem:[#allocation2 + $0x34] sm:$0xf]
    %v68 = vld [vmem:[#allocation2 + $0x38] sm:$0xf]
    %v69 = vld [vmem:[#allocation2 + $0x3c] sm:$0xf]
    %v86 = vunpack.c.l.b16 %v54
    %v87 = vunpack.c.l.b16 %v55
    %v88 = vunpack.c.l.b16 %v56
    %v89 = vunpack.c.l.b16 %v57
    %v90 = vunpack.c.l.b16 %v58
    %v91 = vunpack.c.l.b16 %v59
    %v92 = vunpack.c.l.b16 %v60
    %v93 = vunpack.c.l.b16 %v61
    %v94 = vunpack.c.l.b16 %v62
    %v95 = vunpack.c.l.b16 %v63
    %v96 = vunpack.c.l.b16 %v64
    %v97 = vunpack.c.l.b16 %v65
    %v98 = vunpack.c.l.b16 %v66
    %v99 = vunpack.c.l.b16 %v67
    %v100 = vunpack.c.l.b16 %v68
    %v101 = vunpack.c.l.b16 %v69
    %v102 = vpack.c.b16 %v87, %v86
    %v103 = vpack.c.b16 %v89, %v88
    %v104 = vpack.c.b16 %v91, %v90
    %v105 = vpack.c.b16 %v93, %v92
    %v106 = vpack.c.b16 %v95, %v94
    %v107 = vpack.c.b16 %v97, %v96
    %v108 = vpack.c.b16 %v99, %v98
    %v109 = vpack.c.b16 %v101, %v100
    %118 = vmatpush.bf16.msra.mxu0 %v109
    %119 = vmatpush.bf16.msra.mxu0 %v108
    %120 = vmatpush.bf16.msra.mxu0 %v107
    %121 = vmatpush.bf16.msra.mxu0 %v106
    %122 = vmatpush.bf16.msra.mxu0 %v105
    %123 = vmatpush.bf16.msra.mxu0 %v104
    %124 = vmatpush.bf16.msra.mxu0 %v103
    %125 = vmatpush.bf16.msra.mxu0 %v102
    %126 = vmatmul.bf16.gmra.mxu0 %v53
    %v127 = vpop.f32.mrf.mxu0
    %v128 = vadd.f32 0.0, %v127
    %v129 = vpop.f32.mrf.mxu0
    %130 = vdwg.mxu0
    %v131 = vtanh.pop %v128
    %v132 = vpack.c.bf16 %v131, %v131
    %v133 = vld [vmem:[#allocation5] sm:$0xff]
    %v134 = vld [vmem:[#allocation5 + $0x8] sm:$0xf]
    %v135 = vld [vmem:[#allocation5 + $0xc] sm:$0xff]
    %v136 = vld [vmem:[#allocation5 + $0x14] sm:$0xf]
    %v137 = vld [vmem:[#allocation5 + $0x18] sm:$0xff]
    %v138 = vld [vmem:[#allocation5 + $0x20] sm:$0xf]
    %v139 = vld [vmem:[#allocation5 + $0x24] sm:$0xff]
    %v140 = vld [vmem:[#allocation5 + $0x2c] sm:$0xf]
    %v141 = vld [vmem:[#allocation5 + $0x30] sm:$0xff]
    %v142 = vld [vmem:[#allocation5 + $0x38] sm:$0xf]
    %v143 = vld [vmem:[#allocation5 + $0x3c] sm:$0xff]
    %v144 = vld [vmem:[#allocation5 + $0x44] sm:$0xf]
    %v145 = vld [vmem:[#allocation5 + $0x48] sm:$0xff]
    %v146 = vld [vmem:[#allocation5 + $0x50] sm:$0xf]
    %v147 = vld [vmem:[#allocation5 + $0x54] sm:$0xff]
    %v148 = vld [vmem:[#allocation5 + $0x5c] sm:$0xf]
    %v149 = vld [vmem:[#allocation5 + $0x60] sm:$0xff]
    %v150 = vld [vmem:[#allocation5 + $0x68] sm:$0xf]
    %v151 = vld [vmem:[#allocation5 + $0x6c] sm:$0xff]
    %v152 = vld [vmem:[#allocation5 + $0x74] sm:$0xf]
    %v153 = vld [vmem:[#allocation5 + $0x78] sm:$0xff]
    %v154 = vld [vmem:[#allocation5 + $0x80] sm:$0xf]
    %v155 = vld [vmem:[#allocation5 + $0x84] sm:$0xff]
    %v156 = vld [vmem:[#allocation5 + $0x8c] sm:$0xf]
    %v157 = vld [vmem:[#allocation5 + $0x90] sm:$0xff]
    %v158 = vld [vmem:[#allocation5 + $0x98] sm:$0xf]
    %v159 = vld [vmem:[#allocation5 + $0x9c] sm:$0xff]
    %v160 = vld [vmem:[#allocation5 + $0xa4] sm:$0xf]
    %v161 = vld [vmem:[#allocation5 + $0xa8] sm:$0xff]
    %v162 = vld [vmem:[#allocation5 + $0xb0] sm:$0xf]
    %v163 = vld [vmem:[#allocation5 + $0xb4] sm:$0xff]
    %v164 = vld [vmem:[#allocation5 + $0xbc] sm:$0xf]
    %v197 = vunpack.c.l.b16 %v133
    %v198 = vunpack.c.h.b16 %v133
    %v199 = vunpack.c.l.b16 %v134
    %v200 = vunpack.c.l.b16 %v135
    %v201 = vunpack.c.h.b16 %v135
    %v202 = vunpack.c.l.b16 %v136
    %v203 = vunpack.c.l.b16 %v137
    %v204 = vunpack.c.h.b16 %v137
    %v205 = vunpack.c.l.b16 %v138
    %v206 = vunpack.c.l.b16 %v139
    %v207 = vunpack.c.h.b16 %v139
    %v208 = vunpack.c.l.b16 %v140
    %v209 = vunpack.c.l.b16 %v141
    %v210 = vunpack.c.h.b16 %v141
    %v211 = vunpack.c.l.b16 %v142
    %v212 = vunpack.c.l.b16 %v143
    %v213 = vunpack.c.h.b16 %v143
    %v214 = vunpack.c.l.b16 %v144
    %v215 = vunpack.c.l.b16 %v145
    %v216 = vunpack.c.h.b16 %v145
    %v217 = vunpack.c.l.b16 %v146
    %v218 = vunpack.c.l.b16 %v147
    %v219 = vunpack.c.h.b16 %v147
    %v220 = vunpack.c.l.b16 %v148
    %v221 = vunpack.c.l.b16 %v149
    %v222 = vunpack.c.h.b16 %v149
    %v223 = vunpack.c.l.b16 %v150
    %v224 = vunpack.c.l.b16 %v151
    %v225 = vunpack.c.h.b16 %v151
    %v226 = vunpack.c.l.b16 %v152
    %v227 = vunpack.c.l.b16 %v153
    %v228 = vunpack.c.h.b16 %v153
    %v229 = vunpack.c.l.b16 %v154
    %v230 = vunpack.c.l.b16 %v155
    %v231 = vunpack.c.h.b16 %v155
    %v232 = vunpack.c.l.b16 %v156
    %v233 = vunpack.c.l.b16 %v157
    %v234 = vunpack.c.h.b16 %v157
    %v235 = vunpack.c.l.b16 %v158
    %v236 = vunpack.c.l.b16 %v159
    %v237 = vunpack.c.h.b16 %v159
    %v238 = vunpack.c.l.b16 %v160
    %v239 = vunpack.c.l.b16 %v161
    %v240 = vunpack.c.h.b16 %v161
    %v241 = vunpack.c.l.b16 %v162
    %v242 = vunpack.c.l.b16 %v163
    %v243 = vunpack.c.h.b16 %v163
    %v244 = vunpack.c.l.b16 %v164
    %v245 = vpack.c.b16 %v200, %v197
    %v246 = vpack.c.b16 %v201, %v198
    %v247 = vpack.c.b16 %v202, %v199
    %v248 = vpack.c.b16 %v206, %v203
    %v249 = vpack.c.b16 %v207, %v204
    %v250 = vpack.c.b16 %v208, %v205
    %v251 = vpack.c.b16 %v212, %v209
    %v252 = vpack.c.b16 %v213, %v210
    %v253 = vpack.c.b16 %v214, %v211
    %v254 = vpack.c.b16 %v218, %v215
    %v255 = vpack.c.b16 %v219, %v216
    %v256 = vpack.c.b16 %v220, %v217
    %v257 = vpack.c.b16 %v224, %v221
    %v258 = vpack.c.b16 %v225, %v222
    %v259 = vpack.c.b16 %v226, %v223
    %v260 = vpack.c.b16 %v230, %v227
    %v261 = vpack.c.b16 %v231, %v228
    %v262 = vpack.c.b16 %v232, %v229
    %v263 = vpack.c.b16 %v236, %v233
    %v264 = vpack.c.b16 %v237, %v234
    %v265 = vpack.c.b16 %v238, %v235
    %v266 = vpack.c.b16 %v242, %v239
    %v267 = vpack.c.b16 %v243, %v240
    %v268 = vpack.c.b16 %v244, %v241
    %293 = vmatpush.bf16.msra.mxu0 %v266
    %294 = vmatpush.bf16.msra.mxu0 %v263
    %295 = vmatpush.bf16.msra.mxu0 %v260
    %296 = vmatpush.bf16.msra.mxu0 %v257
    %297 = vmatpush.bf16.msra.mxu0 %v254
    %298 = vmatpush.bf16.msra.mxu0 %v251
    %299 = vmatpush.bf16.msra.mxu0 %v248
    %300 = vmatpush.bf16.msra.mxu0 %v245
    %301 = vmatmul.bf16.gmra.mxu0 %v132
    %v302 = vpop.f32.mrf.mxu0
    %v303 = vadd.f32 0.0, %v302
    %v304 = vpop.f32.mrf.mxu0
    %305 = vdwg.mxu0
    %306 = vmatpush.bf16.msra.mxu0 %v267
    %307 = vmatpush.bf16.msra.mxu0 %v264
    %308 = vmatpush.bf16.msra.mxu0 %v261
    %309 = vmatpush.bf16.msra.mxu0 %v258
    %310 = vmatpush.bf16.msra.mxu0 %v255
    %311 = vmatpush.bf16.msra.mxu0 %v252
    %312 = vmatpush.bf16.msra.mxu0 %v249
    %313 = vmatpush.bf16.msra.mxu0 %v246
    %314 = vmatmul.bf16.gmra.mxu0 %v132
    %v315 = vpop.f32.mrf.mxu0
    %v316 = vadd.f32 0.0, %v315
    %v317 = vpop.f32.mrf.mxu0
    %318 = vdwg.mxu0
    %319 = vmatpush.bf16.msra.mxu0 %v268
    %320 = vmatpush.bf16.msra.mxu0 %v265
    %321 = vmatpush.bf16.msra.mxu0 %v262
    %322 = vmatpush.bf16.msra.mxu0 %v259
    %323 = vmatpush.bf16.msra.mxu0 %v256
    %324 = vmatpush.bf16.msra.mxu0 %v253
    %325 = vmatpush.bf16.msra.mxu0 %v250
    %326 = vmatpush.bf16.msra.mxu0 %v247
    %327 = vmatmul.bf16.gmra.mxu0 %v132
    %v328 = vpop.f32.mrf.mxu0
    %v329 = vadd.f32 0.0, %v328
    %v330 = vpop.f32.mrf.mxu0
    %331 = vdwg.mxu0
    %332 = vst [vmem:[#allocation7] sm:$0xff] %v303
    %333 = vst [vmem:[#allocation7 + $0x8] sm:$0xff] %v316
    %334 = vst [vmem:[#allocation7 + $0x10] sm:$0xff] %v329
    %v335 = vlaneseq
    %v336 = vand.u32 %v335, 127
    %vm337 = vcmp.lt.s32.totalorder %v336, 5
    %s338 = smul.u32 0, 8
    %v339 = vlaneseq
    %v340 = vshrl.u32 %v339, 7
    %v341 = vstv %s338
    %v342 = vadd.s32 %v341, %v340
    %vm343 = vcmp.lt.s32.totalorder %v342, 2
    %v344 = vsel %vm343, 1, 0
    %v345 = vcvt.s32.f32 %v344
    %v346 = vld [vmem:[%s1] sm:$0xff]
    %v347 = vsel %vm337, %v303, -1e+30
    %348 = vmax.xlane.f32.xlu0 %v347
    %v349 = vpop.xlane.xlu0 %348
    %v350 = vsub.f32 %v347, %v349
    %v351 = vmul.f32 %v350, 1.442695
    %v352 = vpow.pop %v351
    %353 = vadd.xlane.f32.xlu0 %v352
    %v354 = vpop.xlane.xlu0 %353
    %v355 = vlog2.pop %v354
    %v356 = vmul.f32 %v355, 0.6931472
    %v357 = vadd.f32 %v349, %v356
    %358 = vset.pattern.permute.xlu0 0
    %359 = vperm.xlu0 %358, %v346
    %v360 = vpop.permute.xlu0 %359
    %vm361 = vcmp.eq.s32.totalorder %v336, %v360
    %v362 = vsel %vm361, %v347, 0.0
    %363 = vadd.xlane.f32.xlu0 %v362
    %v364 = vpop.xlane.xlu0 %363
    %v365 = vsub.f32 %v357, %v364
    %v366 = vadd.f32 %v365, 0.0
    %v367 = vsel %vm337, %v316, -1e+30
    %368 = vmax.xlane.f32.xlu0 %v367
    %v369 = vpop.xlane.xlu0 %368
    %v370 = vsub.f32 %v367, %v369
    %v371 = vmul.f32 %v370, 1.442695
    %v372 = vpow.pop %v371
    %373 = vadd.xlane.f32.xlu0 %v372
    %v374 = vpop.xlane.xlu0 %373
    %v375 = vlog2.pop %v374
    %v376 = vmul.f32 %v375, 0.6931472
    %v377 = vadd.f32 %v369, %v376
    %378 = vset.pattern.permute.xlu0 1
    %379 = vperm.xlu0 %378, %v346
    %v380 = vpop.permute.xlu0 %379
    %vm381 = vcmp.eq.s32.totalorder %v336, %v380
    %v382 = vsel %vm381, %v367, 0.0
    %383 = vadd.xlane.f32.xlu0 %v382
    %v384 = vpop.xlane.xlu0 %383
    %v385 = vsub.f32 %v377, %v384
    %v386 = vadd.f32 %v366, %v385
    %v387 = vsel %vm337, %v329, -1e+30
    %388 = vmax.xlane.f32.xlu0 %v387
    %v389 = vpop.xlane.xlu0 %388
    %v390 = vsub.f32 %v387, %v389
    %v391 = vmul.f32 %v390, 1.442695
    %v392 = vpow.pop %v391
    %393 = vadd.xlane.f32.xlu0 %v392
    %v394 = vpop.xlane.xlu0 %393
    %v395 = vlog2.pop %v394
    %v396 = vmul.f32 %v395, 0.6931472
    %v397 = vadd.f32 %v389, %v396
    %398 = vset.pattern.permute.xlu0 2
    %399 = vperm.xlu0 %398, %v346
    %v400 = vpop.permute.xlu0 %399
    %vm401 = vcmp.eq.s32.totalorder %v336, %v400
    %v402 = vsel %vm401, %v387, 0.0
    %403 = vadd.xlane.f32.xlu0 %v402
    %v404 = vpop.xlane.xlu0 %403
    %v405 = vsub.f32 %v397, %v404
    %v406 = vadd.f32 %v386, %v405
    %v407 = vmul.f32 %v406, %v345
    %vm408 = vcmask 7168
    %v409 = vsel %vm408, %v407, 0.0
    %410 = vadd.xlane.f32.xlu0 %v409
    %v411 = vpop.xlane.xlu0 %410
    %v412 = vrot.slane %v411, 4
    %v413 = vadd.f32 %v411, %v412
    %v414 = vrot.slane %v413, 2
    %v415 = vadd.f32 %v413, %v414
    %v416 = vrot.slane %v415, 1
    %v417 = vadd.f32 %v415, %v416
    %s418 = vtos %v417
    %v419 = vstv %s418
    %vm420 = vcmask 0
    %421 = vst.msk [vmem:[#allocation8] sm:$0x1] %vm420, %v419
    // Predicated region
    $region26: #{tpu_custom_call.1} parent=1 // pred_check
      _
    $region27: #{tpu_custom_call.1} parent=1 // pred_check_branch
      %423 = sbr.rel (0) target = $region29
    $region28: #{tpu_custom_call.1} parent=1 // pred_region
      %425 = vsyncadd [#allocation4], 0
      %s427 = sshll.u32 [#allocation7], 4
      %s428 = int_to_ptr.vmem [resolvable:$true] %s427
      %s429 = sshll.u32 %s4, 4
      %s430 = int_to_ptr.hbm [resolvable:$true] %s429
      %432 = dma.vmem_to_hbm [thread:$0]  %s428, 384, %s430, [#allocation4]
    $region29: #{tpu_custom_call.1} parent=1 // pred_fallthru
      _
    // Predicated region
    $region30: #{tpu_custom_call.1} parent=1 // pred_check
      _
    $region31: #{tpu_custom_call.1} parent=1 // pred_check_branch
      %434 = sbr.rel (0) target = $region33
    $region32: #{tpu_custom_call.1} parent=1 // pred_region
      %436 = vsyncadd [#allocation9], 0
      %s438 = sshll.u32 [#allocation8], 4
      %s439 = int_to_ptr.vmem [resolvable:$true] %s438
      %s440 = sshll.u32 %s5, 4
      %s441 = int_to_ptr.hbm [resolvable:$true] %s440
      %443 = dma.vmem_to_hbm [thread:$0]  %s439, 16, %s441, [#allocation9]
    $region33: #{tpu_custom_call.1} parent=1 // pred_fallthru
      _
    // Predicated region
    $region34: #{tpu_custom_call.1} parent=1 // pred_check
      _
    $region35: #{tpu_custom_call.1} parent=1 // pred_check_branch
      %445 = sbr.rel (0) target = $region37
    $region36: #{tpu_custom_call.1} parent=1 // pred_region
      %447 = dma.done [#allocation4], 384
    $region37: #{tpu_custom_call.1} parent=1 // pred_fallthru
      _
    // Predicated region
    $region38: #{tpu_custom_call.1} parent=1 // pred_check
      _
    $region39: #{tpu_custom_call.1} parent=1 // pred_check_branch
      %449 = sbr.rel (0) target = $region41
    $region40: #{tpu_custom_call.1} parent=1 // pred_region
      %451 = dma.done [#allocation9], 16
    $region41: #{tpu_custom_call.1} parent=1 // pred_fallthru
      _
    %452 = vsyncpa [#allocation3], 1
    %453 = vsyncpa [#allocation6], 1
    %454 = vsyncpa [#allocation4], 1
    %455 = vsyncpa [#allocation9], 1

</llo_original>
